<compile_context>
chip_gen: v7x
topology: tpu7x:2x2x1
jax: 0.10.0
libtpu: 0.0.40
codegen_flags: <defaults>
</compile_context>

<pallas_src>
import math

import jax
import jax.numpy as jnp
from jax.experimental import pallas as pl
from jax.experimental.pallas import tpu as pltpu

# ---------------- problem sizes (small, per the module's docstring) ----------------
B = 32                        # batch (sublane-aligned, tiled by the grid)
TB = 16                       # batch tile per grid step
M = 16                        # latent dim
HID = 128                     # decoder hidden width (lane-dense)
C, IMG_H, IMG_W = 1, 16, 16   # decoded "image" -> 3 event dims for Independent(..., 3)
D_OUT = C * IMG_H * IMG_W     # 256, lane-dense (2 x 128)

SCALE = 0.1                   # fixed Normal scale from the module
_LOG_NORM = math.log(SCALE) + 0.5 * math.log(2.0 * math.pi)
_INV_VAR = 1.0 / (SCALE * SCALE)


def gaussian_decoder_kernel(z_ref, x_ref, w1b_ref, w2b_ref, mean_ref, lp_ref):
    """One batch tile: means = decoder_net(z); log_prob(x) under N(means, 0.1)^{C*H*W}."""
    z = z_ref[...]                                                    # (TB, M)

    # decoder_net: Linear(M, HID) -> tanh -> Linear(HID, D_OUT)
    # (biases live in the last row of the packed weight slabs; static, aligned slices)
    h = jnp.tanh(
        jnp.dot(z, w1b_ref[:M, :], preferred_element_type=jnp.float32)
        + w1b_ref[M:M + 1, :]
    )                                                                 # (TB, HID)
    means = (
        jnp.dot(h, w2b_ref[:HID, :], preferred_element_type=jnp.float32)
        + w2b_ref[HID:HID + 1, :]
    )                                                                 # (TB, D_OUT)
    mean_ref[...] = means

    # log_prob of x under Independent(Normal(means, SCALE), 3):
    #   sum_d [ -0.5*((x-mean)/scale)^2 - log(scale) - 0.5*log(2*pi) ]
    # constant term hoisted out of the reduction; keepdims keeps everything 2-D.
    diff = x_ref[...] - means                                         # (TB, D_OUT)
    sq = jnp.sum(diff * diff, axis=-1, keepdims=True)                 # (TB, 1)
    lp_ref[...] = -0.5 * _INV_VAR * sq - D_OUT * _LOG_NORM


def gaussian_decoder_forward(z, x, w1b, w2b):
    """Pallas forward. Returns (means (B,C,IMG_H,IMG_W), log_prob (B,))."""
    x2d = x.reshape(B, D_OUT)
    means2d, lp = pl.pallas_call(
        gaussian_decoder_kernel,
        out_shape=(
            jax.ShapeDtypeStruct((B, D_OUT), jnp.float32),
            jax.ShapeDtypeStruct((B, 1), jnp.float32),
        ),
        grid_spec=pltpu.PrefetchScalarGridSpec(
            num_scalar_prefetch=0,
            grid=(B // TB,),
            in_specs=[
                pl.BlockSpec((TB, M), lambda i: (i, 0)),           # z tile
                pl.BlockSpec((TB, D_OUT), lambda i: (i, 0)),       # x tile
                pl.BlockSpec((M + 1, HID), lambda i: (0, 0)),      # W1|b1 (resident)
                pl.BlockSpec((HID + 1, D_OUT), lambda i: (0, 0)),  # W2|b2 (resident)
            ],
            out_specs=(
                pl.BlockSpec((TB, D_OUT), lambda i: (i, 0)),       # means tile
                pl.BlockSpec((TB, 1), lambda i: (i, 0)),           # per-example log-prob
            ),
        ),
        compiler_params=pltpu.CompilerParams(
            dimension_semantics=("parallel",),   # batch tiles -> both TCs on v7x
        ),
    )(z, x2d, w1b, w2b)
    # TODO(synk): the td.Independent(td.Normal(...)) *object* has no tensor
    # equivalent; the kernel returns its loc plus log_prob(x) under it instead.
    return means2d.reshape(B, C, IMG_H, IMG_W), lp[:, 0]


def _reference(z, x, w1, b1, w2, b2):
    """Pure-JAX reference matching torch.distributions semantics."""
    hp = jax.lax.Precision.HIGHEST
    h = jnp.tanh(jnp.dot(z, w1, precision=hp) + b1)
    means = (jnp.dot(h, w2, precision=hp) + b2).reshape(B, C, IMG_H, IMG_W)
    lp_el = (-0.5 * ((x - means) / SCALE) ** 2
             - jnp.log(SCALE) - 0.5 * jnp.log(2.0 * jnp.pi))
    return means, jnp.sum(lp_el, axis=(1, 2, 3))


if __name__ == "__main__":
    key = jax.random.PRNGKey(0)
    kz, kx, kw1, kb1, kw2, kb2 = jax.random.split(key, 6)

    # deterministic latents and "image" data
    z = jax.random.normal(kz, (B, M), jnp.float32)
    x = jax.random.uniform(kx, (B, C, IMG_H, IMG_W), jnp.float32)

    # decoder_net parameters
    w1 = 0.1 * jax.random.normal(kw1, (M, HID), jnp.float32)
    b1 = 0.05 * jax.random.normal(kb1, (1, HID), jnp.float32)
    w2 = 0.05 * jax.random.normal(kw2, (HID, D_OUT), jnp.float32)
    b2 = 0.05 * jax.random.normal(kb2, (1, D_OUT), jnp.float32)

    # pack each bias as the last row of its weight slab (fewer kernel operands)
    w1b = jnp.concatenate([w1, b1], axis=0)    # (M+1, HID)
    w2b = jnp.concatenate([w2, b2], axis=0)    # (HID+1, D_OUT)

    means, lp = jax.block_until_ready(gaussian_decoder_forward(z, x, w1b, w2b))
    ref_means, ref_lp = _reference(z, x, w1, b1, w2, b2)

    assert means.shape == (B, C, IMG_H, IMG_W) and lp.shape == (B,)
    assert bool(jnp.all(jnp.isfinite(means))) and bool(jnp.all(jnp.isfinite(lp)))
    assert jnp.allclose(means, ref_means, rtol=1e-4, atol=1e-4), float(
        jnp.max(jnp.abs(means - ref_means)))
    assert jnp.allclose(lp, ref_lp, rtol=1e-4, atol=1e-2), float(
        jnp.max(jnp.abs(lp - ref_lp)))
    print("KERNEL_OK")
</pallas_src>

<mosaic_0001>
module attributes {stable_mosaic.version = 11 : i64} {
  func.func @gaussian_decoder_kernel(%arg0: i32, %arg1: memref<16x16xf32, #tpu.memory_space<vmem>>, %arg2: memref<16x256xf32, #tpu.memory_space<vmem>>, %arg3: memref<17x128xf32, #tpu.memory_space<vmem>>, %arg4: memref<129x256xf32, #tpu.memory_space<vmem>>, %arg5: memref<16x256xf32, #tpu.memory_space<vmem>>, %arg6: memref<16x1xf32, #tpu.memory_space<vmem>>) attributes {dimension_semantics = [#tpu.dimension_semantics<parallel>], iteration_bounds = array<i64: 2>, scalar_prefetch = 0 : i64, scratch_operands = 0 : i64, tpu.core_type = #tpu.core_type<tc>, window_params = [{transform_indices = @transform_0, window_bounds = array<i64: 16, 16>}, {transform_indices = @transform_1, window_bounds = array<i64: 16, 256>}, {pipeline_mode = #tpu.pipeline_mode<synchronous>, transform_indices = @transform_2, window_bounds = array<i64: 17, 128>}, {pipeline_mode = #tpu.pipeline_mode<synchronous>, transform_indices = @transform_3, window_bounds = array<i64: 129, 256>}, {transform_indices = @transform_4, window_bounds = array<i64: 16, 256>}, {transform_indices = @transform_5, window_bounds = array<i64: 16, 1>}]} {
    %c0 = arith.constant 0 : index
    %c0_0 = arith.constant 0 : index
    %0 = vector.load %arg1[%c0, %c0_0] : memref<16x16xf32, #tpu.memory_space<vmem>>, vector<16x16xf32>
    %c0_1 = arith.constant 0 : index
    %c0_2 = arith.constant 0 : index
    %1 = vector.load %arg3[%c0_1, %c0_2] : memref<17x128xf32, #tpu.memory_space<vmem>>, vector<16x128xf32>
    %cst = arith.constant dense<0.000000e+00> : vector<16x128xf32>
    %2 = tpu.matmul %0, %1, %cst {dimension_numbers = #tpu.dot_dimension_numbers<[1], [0], [0], [1], [0, 0, 1, 1], [], []>} : vector<16x16xf32>, vector<16x128xf32>, vector<16x128xf32> -> vector<16x128xf32>
    %c16 = arith.constant 16 : index
    %c0_3 = arith.constant 0 : index
    %3 = vector.load %arg3[%c16, %c0_3] : memref<17x128xf32, #tpu.memory_space<vmem>>, vector<1x128xf32>
    %4 = vector.broadcast %3 : vector<1x128xf32> to vector<16x128xf32>
    %5 = arith.addf %2, %4 : vector<16x128xf32>
    %6 = math.tanh %5 : vector<16x128xf32>
    %c0_4 = arith.constant 0 : index
    %c0_5 = arith.constant 0 : index
    %7 = vector.load %arg4[%c0_4, %c0_5] : memref<129x256xf32, #tpu.memory_space<vmem>>, vector<128x256xf32>
    %cst_6 = arith.constant dense<0.000000e+00> : vector<16x256xf32>
    %8 = tpu.matmul %6, %7, %cst_6 {dimension_numbers = #tpu.dot_dimension_numbers<[1], [0], [0], [1], [0, 0, 1, 1], [], []>} : vector<16x128xf32>, vector<128x256xf32>, vector<16x256xf32> -> vector<16x256xf32>
    %c128 = arith.constant 128 : index
    %c0_7 = arith.constant 0 : index
    %9 = vector.load %arg4[%c128, %c0_7] : memref<129x256xf32, #tpu.memory_space<vmem>>, vector<1x256xf32>
    %10 = vector.broadcast %9 : vector<1x256xf32> to vector<16x256xf32>
    %11 = arith.addf %8, %10 : vector<16x256xf32>
    %c0_8 = arith.constant 0 : index
    %c0_9 = arith.constant 0 : index
    %12 = vector.load %arg5[%c0_8, %c0_9] : memref<16x256xf32, #tpu.memory_space<vmem>>, vector<16x256xf32>
    tpu.vector_store %arg5[%c0_8, %c0_9], %11 {strides = array<i32>} : memref<16x256xf32, #tpu.memory_space<vmem>>, vector<16x256xf32>,
    %c0_10 = arith.constant 0 : index
    %c0_11 = arith.constant 0 : index
    %13 = vector.load %arg2[%c0_10, %c0_11] : memref<16x256xf32, #tpu.memory_space<vmem>>, vector<16x256xf32>
    %14 = arith.subf %13, %11 : vector<16x256xf32>
    %15 = arith.mulf %14, %14 : vector<16x256xf32>
    %cst_12 = arith.constant dense<0.000000e+00> : vector<16xf32>
    %16 = vector.multi_reduction <add>, %15, %cst_12 [1] : vector<16x256xf32> to vector<16xf32>
    %17 = vector.shape_cast %16 : vector<16xf32> to vector<16x1xf32>
    %cst_13 = arith.constant -5.000000e+01 : f32
    %18 = vector.broadcast %cst_13 : f32 to vector<16x1xf32>
    %19 = arith.mulf %18, %17 : vector<16x1xf32>
    %cst_14 = arith.constant -354.213531 : f32
    %20 = vector.broadcast %cst_14 : f32 to vector<16x1xf32>
    %21 = arith.subf %19, %20 : vector<16x1xf32>
    %c0_15 = arith.constant 0 : index
    %c0_16 = arith.constant 0 : index
    %22 = vector.load %arg6[%c0_15, %c0_16] : memref<16x1xf32, #tpu.memory_space<vmem>>, vector<16x1xf32>
    tpu.vector_store %arg6[%c0_15, %c0_16], %21 {strides = array<i32>} : memref<16x1xf32, #tpu.memory_space<vmem>>, vector<16x1xf32>,
    return
  }
  func.func @transform_0(%arg0: i32) -> (i32, i32) {
    %c0_i32 = arith.constant 0 : i32
    %c0_i32_0 = arith.constant 0 : i32
    return %arg0, %c0_i32 : i32, i32
  }
  func.func @transform_1(%arg0: i32) -> (i32, i32) {
    %c0_i32 = arith.constant 0 : i32
    %c0_i32_0 = arith.constant 0 : i32
    return %arg0, %c0_i32 : i32, i32
  }
  func.func @transform_2(%arg0: i32) -> (i32, i32) {
    %c0_i32 = arith.constant 0 : i32
    %c0_i32_0 = arith.constant 0 : i32
    %c0_i32_1 = arith.constant 0 : i32
    return %c0_i32, %c0_i32_0 : i32, i32
  }
  func.func @transform_3(%arg0: i32) -> (i32, i32) {
    %c0_i32 = arith.constant 0 : i32
    %c0_i32_0 = arith.constant 0 : i32
    %c0_i32_1 = arith.constant 0 : i32
    return %c0_i32, %c0_i32_0 : i32, i32
  }
  func.func @transform_4(%arg0: i32) -> (i32, i32) {
    %c0_i32 = arith.constant 0 : i32
    %c0_i32_0 = arith.constant 0 : i32
    return %arg0, %c0_i32 : i32, i32
  }
  func.func @transform_5(%arg0: i32) -> (i32, i32) {
    %c0_i32 = arith.constant 0 : i32
    %c0_i32_0 = arith.constant 0 : i32
    return %arg0, %c0_i32 : i32, i32
  }
}

</mosaic_0001>

<llo_original>
// kernel: tpu_custom_call.1
$region0: #{tpu_custom_call.1}
  #allocation0 [shape = 'u32[]', space=smem, size = 0x4, offset = 0x4, fixed_abs, tag = 'smem constant byte address 0x4 - core index']
  #allocation1 [shape = 'u32[144,128]{1,0:T(1,128)}', space=vmem, size = 0x12000, scoped, tag = 'internal scratch']
  %s0 = inlined_call_operand.vmem [shape: f32[32,16], index: 0, kind: input, shape index: {}]
  %s1 = inlined_call_operand.hbm [shape: f32[32,256], index: 1, kind: input, shape index: {}]
  %s2 = inlined_call_operand.vmem [shape: f32[17,128], index: 2, kind: input, shape index: {}]
  %s3 = inlined_call_operand.hbm [shape: f32[129,256], index: 3, kind: input, shape index: {}]
  %s4 = inlined_call_operand.hbm [shape: f32[32,256], index: 4, kind: output, shape index: {0}]
  %s5 = inlined_call_operand.vmem [shape: f32[32,1], index: 5, kind: output, shape index: {1}]
  %6 = xla_tuple %s4, %s5
  %s7 = sld [smem:[#allocation0]]
  $region65: #{tpu_custom_call.1} parent=0
    _
  %s9 = ssub.s32 1, %s7
  %s10 = scalar_select 0, %s9, %s7
  $region1: #{tpu_custom_call.1} parent=0
    #allocation2 [shape = 'u8[32768]{0}', space=vmem, size = 0x8000, scoped, tag = 'input window, operand 1']
    #allocation3 [shape = 's32[2]{0}', space=sflag, size = 0x8, scoped, tag = 'scoped memory for tpu_custom_call.1']
    #allocation4 [shape = 's32[2]{0}', space=sflag, size = 0x8, scoped, tag = 'scoped memory for tpu_custom_call.1']
    #allocation5 [shape = 'u8[139264]{0}', space=vmem, size = 0x22000, scoped, tag = 'input window, operand 3, single buffered']
    #allocation6 [shape = 's32[1]{0}', space=sflag, size = 0x4, scoped, tag = 'scoped memory for tpu_custom_call.1']
    #allocation7 [shape = 'u8[32768]{0}', space=vmem, size = 0x8000, scoped, tag = 'output window, operand 0']
    %11 = vsyncpa [#allocation3], 0
    %s12 = scalar_lea.sflag [#allocation3], 1
    %13 = vsyncpa %s12, 0
    %14 = vsyncpa [#allocation6], 0
    %15 = vsyncpa [#allocation4], 0
    %s16 = scalar_lea.sflag [#allocation4], 1
    %17 = vsyncpa %s16, 0
    loop: start=0, step=1, limit=4
    $region2: #{tpu_custom_call.1} parent=1 // loop_pre_header
      _
    $region3: #{tpu_custom_call.1} parent=1 // loop_header
      %s19 = sphi 0, %s23
      %p20 = scmp.ge.s32.totalorder %s19, 4
      %s29 = sphi 0, %s31
      %s32 = sphi 0, %s29
      %s33 = sphi 0, %s32
      %s49 = sphi 0, %s33
      %s55 = sphi 0, %s57
      %s58 = sphi 0, %s55
      %s59 = sphi 0, %s58
      %s75 = sphi 0, %s59
      %s79 = sphi 0, %s79
      %s81 = sphi 0, %s79
      %s82 = sphi 0, %s81
      %s96 = sphi 0, %s82
      %s100 = sphi 0, %s100
      %s102 = sphi 0, %s100
      %s103 = sphi 0, %s102
      %s117 = sphi 0, %s103
      %s123 = sphi 0, %s125
      %s126 = sphi 0, %s123
      %s127 = sphi 0, %s126
      %s143 = sphi 0, %s127
      %s149 = sphi 0, %s151
      %s152 = sphi 0, %s149
      %s153 = sphi 0, %s152
      %s169 = sphi 0, %s153
    $region4: #{tpu_custom_call.1} parent=1 // loop_header_branch
      %22 = sbr.rel (%p20) target = $region8
    $region5: #{tpu_custom_call.1} parent=1 // loop_body
      %s24 = ssub.s32 %s19, 1
      %s25 = ssub.s32 %s19, 2
      %s26 = sadd.s32 %s19, 1
      %s27 = ssub.s32 %s19, %s26
      %p28 = scmp.eq.s32.totalorder %s27, 0
      %s30 = sadd.s32 %s29, 1
      %s31 = scalar_select %p28, %s29, %s30
      %p34 = pneg %p28
      %p35 = scmp.eq.s32.totalorder %s19, 1
      %p36 = por %p34, %p35
      %p37 = scmp.ne.s32.totalorder %s29, %s32
      %p38 = scmp.eq.s32.totalorder %s19, 0
      %p39 = por %p37, %p38
      %p40 = scmp.ne.s32.totalorder %s29, %s32
      %p41 = scmp.eq.s32.totalorder %s24, 1
      %p42 = por %p40, %p41
      %p43 = scmp.ne.s32.totalorder %s32, %s33
      %p44 = scmp.eq.s32.totalorder %s24, 0
      %p45 = por %p43, %p44
      %p46 = scmp.ne.s32.totalorder %s32, %s33
      %p47 = scmp.eq.s32.totalorder %s25, 1
      %p48 = por %p46, %p47
      %p50 = scmp.ne.s32.totalorder %s33, %s49
      %p51 = scmp.eq.s32.totalorder %s25, 0
      %p52 = por %p50, %p51
      %s53 = ssub.s32 %s19, %s26
      %p54 = scmp.eq.s32.totalorder %s53, 0
      %s56 = sadd.s32 %s55, 1
      %s57 = scalar_select %p54, %s55, %s56
      %p60 = pneg %p54
      %p61 = scmp.eq.s32.totalorder %s19, 1
      %p62 = por %p60, %p61
      %p63 = scmp.ne.s32.totalorder %s55, %s58
      %p64 = scmp.eq.s32.totalorder %s19, 0
      %p65 = por %p63, %p64
      %p66 = scmp.ne.s32.totalorder %s55, %s58
      %p67 = scmp.eq.s32.totalorder %s24, 1
      %p68 = por %p66, %p67
      %p69 = scmp.ne.s32.totalorder %s58, %s59
      %p70 = scmp.eq.s32.totalorder %s24, 0
      %p71 = por %p69, %p70
      %p72 = scmp.ne.s32.totalorder %s58, %s59
      %p73 = scmp.eq.s32.totalorder %s25, 1
      %p74 = por %p72, %p73
      %p76 = scmp.ne.s32.totalorder %s59, %s75
      %p77 = scmp.eq.s32.totalorder %s25, 0
      %p78 = por %p76, %p77
      %s80 = sadd.s32 %s79, 1
      %p83 = scmp.eq.s32.totalorder %s19, 1
      %p84 = scmp.ne.s32.totalorder %s79, %s81
      %p85 = scmp.eq.s32.totalorder %s19, 0
      %p86 = por %p84, %p85
      %p87 = scmp.ne.s32.totalorder %s79, %s81
      %p88 = scmp.eq.s32.totalorder %s24, 1
      %p89 = por %p87, %p88
      %p90 = scmp.ne.s32.totalorder %s81, %s82
      %p91 = scmp.eq.s32.totalorder %s24, 0
      %p92 = por %p90, %p91
      %p93 = scmp.ne.s32.totalorder %s81, %s82
      %p94 = scmp.eq.s32.totalorder %s25, 1
      %p95 = por %p93, %p94
      %p97 = scmp.ne.s32.totalorder %s82, %s96
      %p98 = scmp.eq.s32.totalorder %s25, 0
      %p99 = por %p97, %p98
      %s101 = sadd.s32 %s100, 1
      %p104 = scmp.eq.s32.totalorder %s19, 1
      %p105 = scmp.ne.s32.totalorder %s100, %s102
      %p106 = scmp.eq.s32.totalorder %s19, 0
      %p107 = por %p105, %p106
      %p108 = scmp.ne.s32.totalorder %s100, %s102
      %p109 = scmp.eq.s32.totalorder %s24, 1
      %p110 = por %p108, %p109
      %p111 = scmp.ne.s32.totalorder %s102, %s103
      %p112 = scmp.eq.s32.totalorder %s24, 0
      %p113 = por %p111, %p112
      %p114 = scmp.ne.s32.totalorder %s102, %s103
      %p115 = scmp.eq.s32.totalorder %s25, 1
      %p116 = por %p114, %p115
      %p118 = scmp.ne.s32.totalorder %s103, %s117
      %p119 = scmp.eq.s32.totalorder %s25, 0
      %p120 = por %p118, %p119
      %s121 = ssub.s32 %s19, %s26
      %p122 = scmp.eq.s32.totalorder %s121, 0
      %s124 = sadd.s32 %s123, 1
      %s125 = scalar_select %p122, %s123, %s124
      %p128 = pneg %p122
      %p129 = scmp.eq.s32.totalorder %s19, 1
      %p130 = por %p128, %p129
      %p131 = scmp.ne.s32.totalorder %s123, %s126
      %p132 = scmp.eq.s32.totalorder %s19, 0
      %p133 = por %p131, %p132
      %p134 = scmp.ne.s32.totalorder %s123, %s126
      %p135 = scmp.eq.s32.totalorder %s24, 1
      %p136 = por %p134, %p135
      %p137 = scmp.ne.s32.totalorder %s126, %s127
      %p138 = scmp.eq.s32.totalorder %s24, 0
      %p139 = por %p137, %p138
      %p140 = scmp.ne.s32.totalorder %s126, %s127
      %p141 = scmp.eq.s32.totalorder %s25, 1
      %p142 = por %p140, %p141
      %p144 = scmp.ne.s32.totalorder %s127, %s143
      %p145 = scmp.eq.s32.totalorder %s25, 0
      %p146 = por %p144, %p145
      %s147 = ssub.s32 %s19, %s26
      %p148 = scmp.eq.s32.totalorder %s147, 0
      %s150 = sadd.s32 %s149, 1
      %s151 = scalar_select %p148, %s149, %s150
      %p154 = pneg %p148
      %p155 = scmp.eq.s32.totalorder %s19, 1
      %p156 = por %p154, %p155
      %p157 = scmp.ne.s32.totalorder %s149, %s152
      %p158 = scmp.eq.s32.totalorder %s19, 0
      %p159 = por %p157, %p158
      %p160 = scmp.ne.s32.totalorder %s149, %s152
      %p161 = scmp.eq.s32.totalorder %s24, 1
      %p162 = por %p160, %p161
      %p163 = scmp.ne.s32.totalorder %s152, %s153
      %p164 = scmp.eq.s32.totalorder %s24, 0
      %p165 = por %p163, %p164
      %p166 = scmp.ne.s32.totalorder %s152, %s153
      %p167 = scmp.eq.s32.totalorder %s25, 1
      %p168 = por %p166, %p167
      %p170 = scmp.ne.s32.totalorder %s153, %s169
      %p171 = scmp.eq.s32.totalorder %s25, 0
      %p172 = por %p170, %p171
      %p173 = scmp.le.s32.totalorder 1, %s19
      %p174 = scmp.lt.s32.totalorder %s19, 3
      %p175 = pnand %p173, %p174
      %p176 = pneg %p175
      // Predicated region
      $region9: #{tpu_custom_call.1} parent=5 // pred_check
        _
      $region10: #{tpu_custom_call.1} parent=5 // pred_check_branch
        %178 = sbr.rel (%p175) target = $region12
      $region11: #{tpu_custom_call.1} parent=5 // pred_region
        %s179 = ssub.s32 %s19, 1
        // Predicated region
        $region13: #{tpu_custom_call.1} parent=11 // pred_check
          %p180 = pneg %p92
        $region14: #{tpu_custom_call.1} parent=11 // pred_check_branch
          %182 = sbr.rel (%p180) target = $region16
        $region15: #{tpu_custom_call.1} parent=11 // pred_region
          _
        $region16: #{tpu_custom_call.1} parent=11 // pred_fallthru
          _
        // Predicated region
        $region17: #{tpu_custom_call.1} parent=11 // pred_check
          %p183 = pneg %p113
        $region18: #{tpu_custom_call.1} parent=11 // pred_check_branch
          %185 = sbr.rel (%p183) target = $region20
        $region19: #{tpu_custom_call.1} parent=11 // pred_region
          %s187 = ssub.s32 4352, 4352
          %188 = vsyncadd [#allocation6], %s187
          %s189 = sshll.u32 [#allocation5], 4
          %s190 = int_to_ptr.vmem [resolvable:$true] %s189
          %195 = dma.hbm_to_vmem [thread:$0]  %s3, 4352, %s190, [#allocation6], 256, 256, 16
        $region20: #{tpu_custom_call.1} parent=11 // pred_fallthru
          _
      $region12: #{tpu_custom_call.1} parent=5 // pred_fallthru
        _
      %p196 = scmp.lt.s32.totalorder %s19, 2
      // Predicated region
      $region21: #{tpu_custom_call.1} parent=5 // pred_check
        %p197 = pneg %p196
      $region22: #{tpu_custom_call.1} parent=5 // pred_check_branch
        %199 = sbr.rel (%p197) target = $region24
      $region23: #{tpu_custom_call.1} parent=5 // pred_region
        // Predicated region
        $region25: #{tpu_custom_call.1} parent=23 // pred_check
          %p200 = pneg %p39
        $region26: #{tpu_custom_call.1} parent=23 // pred_check_branch
          %202 = sbr.rel (%p200) target = $region28
        $region27: #{tpu_custom_call.1} parent=23 // pred_region
          %s203 = smul.u32 2, %s19
          %p204 = scmp.lt.s32.totalorder %s203, 3
          %s205 = scalar_select %p204, %s203, 3
          %s206 = smul.addr %s205, 8
          %s207 = scalar_lea.vmem %s0, %s206
          %s208 = smul.u32 2, %s19
        $region28: #{tpu_custom_call.1} parent=23 // pred_fallthru
          _
        // Predicated region
        $region29: #{tpu_custom_call.1} parent=23 // pred_check
          %p209 = pneg %p65
        $region30: #{tpu_custom_call.1} parent=23 // pred_check_branch
          %211 = sbr.rel (%p209) target = $region32
        $region31: #{tpu_custom_call.1} parent=23 // pred_region
          %s212 = sand.u32 %s55, 1
          %s213 = scalar_lea.sflag [#allocation3], %s212
          %s214 = sand.u32 %s55, 1
          %s215 = smul.addr %s214, 32
          %s216 = scalar_lea.vmem [#allocation2], %s215
          %s217 = smul.u32 2, %s19
          %s219 = ssub.s32 512, 512
          %220 = vsyncadd %s213, %s219
          %s221 = smul.addr %s217, 2
          %s222 = smul.addr %s221, 128
          %s223 = scalar_lea.hbm %s1, %s222
          %s224 = sshll.u32 %s216, 4
          %s225 = int_to_ptr.vmem [resolvable:$true] %s224
          %230 = dma.hbm_to_vmem [thread:$0]  %s223, 512, %s225, %s213, 256, 256, 16
        $region32: #{tpu_custom_call.1} parent=23 // pred_fallthru
          _
      $region24: #{tpu_custom_call.1} parent=5 // pred_fallthru
        _
      %p231 = scmp.le.s32.totalorder 1, %s19
      %p232 = scmp.lt.s32.totalorder %s19, 3
      %p233 = pnand %p231, %p232
      %p234 = pneg %p233
      // Predicated region
      $region33: #{tpu_custom_call.1} parent=5 // pred_check
        _
      $region34: #{tpu_custom_call.1} parent=5 // pred_check_branch
        %236 = sbr.rel (%p233) target = $region36
      $region35: #{tpu_custom_call.1} parent=5 // pred_region
        %s237 = ssub.s32 %s19, 1
        %s238 = sand.u32 %s58, 1
        %s239 = scalar_lea.sflag [#allocation3], %s238
        %s240 = sand.u32 %s58, 1
        %s241 = smul.addr %s240, 32
        %s242 = scalar_lea.vmem [#allocation2], %s241
        // Predicated region
        $region37: #{tpu_custom_call.1} parent=35 // pred_check
          %p243 = pneg %p71
        $region38: #{tpu_custom_call.1} parent=35 // pred_check_branch
          %245 = sbr.rel (%p243) target = $region40
        $region39: #{tpu_custom_call.1} parent=35 // pred_region
          %246 = dma.done %s239, 512
        $region40: #{tpu_custom_call.1} parent=35 // pred_fallthru
          _
        // Predicated region
        $region41: #{tpu_custom_call.1} parent=35 // pred_check
          %p247 = pneg %p113
        $region42: #{tpu_custom_call.1} parent=35 // pred_check_branch
          %249 = sbr.rel (%p247) target = $region44
        $region43: #{tpu_custom_call.1} parent=35 // pred_region
          %250 = dma.done [#allocation6], 4352
        $region44: #{tpu_custom_call.1} parent=35 // pred_fallthru
          _
        %s251 = smul.u32 2, %s24
        %p252 = scmp.lt.s32.totalorder %s251, 3
        %s253 = scalar_select %p252, %s251, 3
        %s254 = smul.addr %s253, 8
        %s255 = scalar_lea.vmem %s0, %s254
        %p256 = pneg %p45
        %p257 = pneg %p42
        %s258 = sand.u32 %s58, 1
        %s259 = scalar_lea.sflag [#allocation3], %s258
        %s260 = sand.u32 %s58, 1
        %s261 = smul.addr %s260, 32
        %s262 = scalar_lea.vmem [#allocation2], %s261
        %p263 = pneg %p71
        %p264 = pneg %p68
        %p265 = pneg %p92
        %p266 = pneg %p89
        %p267 = pneg %p113
        %p268 = pneg %p110
        %p269 = pneg %p139
        %p270 = pneg %p136
        %s271 = sand.u32 %s126, 1
        %s272 = scalar_lea.sflag [#allocation4], %s271
        %s273 = sand.u32 %s126, 1
        %s274 = smul.addr %s273, 32
        %s275 = scalar_lea.vmem [#allocation7], %s274
        %p276 = pneg %p165
        %p277 = pneg %p162
        %s278 = smul.u32 2, %s24
        %p279 = scmp.lt.s32.totalorder %s278, 3
        %s280 = scalar_select %p279, %s278, 3
        %s281 = smul.addr %s280, 8
        %s282 = scalar_lea.vmem %s5, %s281
        %s283 = smul.u32 2, %s24
        %p284 = scmp.lt.s32.totalorder %s283, 3
        %s285 = scalar_select %p284, %s283, 3
        %s286 = smul.addr %s285, 8
        %s287 = scalar_lea.vmem %s0, %s286
        %s288 = smul.u32 2, %s24
        %s289 = smul.u32 2, %s24
        %s290 = smul.u32 2, %s24
        %s291 = smul.u32 2, %s24
        %p292 = scmp.lt.s32.totalorder %s291, 3
        %s293 = scalar_select %p292, %s291, 3
        %s294 = smul.addr %s293, 8
        %s295 = scalar_lea.vmem %s5, %s294
        %s296 = smul.u32 2, %s24
        %v297 = vld [vmem:[%s287] sm:$0xff]
        %v298 = vld [vmem:[%s287 + $0x8] sm:$0xff]
        %v299 = vld [vmem:[%s2] sm:$0xff]
        %v300 = vld [vmem:[%s2 + $0x8] sm:$0xff]
        %v301 = vld [vmem:[%s2 + $0x10] sm:$0x1]
        %v302 = vlaneseq
        %v303 = vshrl.u32 %v302, 7
        %v304 = vsub.s32 0, %v303
        %v305 = vrot.slane %v301, %v304
        %vm306 = vcmask 130048
        %v308 = vsel %vm306, %v297, 0
        %v311 = vsel %vm306, %v298, 0
        %313 = vmatprep.subr.mxu0 0.0
        %314 = vmatpush1.msra.mxu0 %v299
        %315 = vmatprep.subr.mxu0 0.0
        %316 = vmatpush1.msra.mxu0 %v300
        %317 = vmatprep.subr.mxu0 0.0
        %318 = vmatpush1.msra.mxu0 0.0
        %319 = vmatprep.subr.mxu0 0.0
        %320 = vmatpush1.msra.mxu0 0.0
        %321 = vmatprep.subr.mxu0 0.0
        %322 = vmatpush1.msra.mxu0 0.0
        %323 = vmatprep.subr.mxu0 0.0
        %324 = vmatpush1.msra.mxu0 0.0
        %325 = vmatprep.subr.mxu0 0.0
        %326 = vmatpush1.msra.mxu0 0.0
        %327 = vmatprep.subr.mxu0 0.0
        %328 = vmatpush1.msra.mxu0 0.0
        %329 = vmatprep.subr.mxu0 0.0
        %330 = vmatpush1.msra.mxu0 0.0
        %331 = vmatprep.subr.mxu0 0.0
        %332 = vmatpush1.msra.mxu0 0.0
        %333 = vmatprep.subr.mxu0 0.0
        %334 = vmatpush1.msra.mxu0 0.0
        %335 = vmatprep.subr.mxu0 0.0
        %336 = vmatpush1.msra.mxu0 0.0
        %337 = vmatprep.subr.mxu0 0.0
        %338 = vmatpush1.msra.mxu0 0.0
        %339 = vmatprep.subr.mxu0 0.0
        %340 = vmatpush1.msra.mxu0 0.0
        %341 = vmatprep.subr.mxu0 0.0
        %342 = vmatpush1.msra.mxu0 0.0
        %343 = vmatprep.subr.mxu0 0.0
        %344 = vmatpush1.msra.mxu0 0.0
        %345 = vmatprep.subr.mxu0 0.0
        %346 = vmatpush1.msra.mxu0 0.0
        %347 = vmatprep.subr.mxu0 0.0
        %348 = vmatpush1.msra.mxu0 0.0
        %349 = vmatprep.subr.mxu0 0.0
        %350 = vmatpush1.msra.mxu0 0.0
        %351 = vmatprep.subr.mxu0 0.0
        %352 = vmatpush1.msra.mxu0 0.0
        %353 = vmatprep.subr.mxu0 0.0
        %354 = vmatpush1.msra.mxu0 0.0
        %355 = vmatprep.subr.mxu0 0.0
        %356 = vmatpush1.msra.mxu0 0.0
        %357 = vmatprep.subr.mxu0 0.0
        %358 = vmatpush1.msra.mxu0 0.0
        %359 = vmatprep.subr.mxu0 0.0
        %360 = vmatpush1.msra.mxu0 0.0
        %361 = vmatprep.subr.mxu0 0.0
        %362 = vmatpush1.msra.mxu0 0.0
        %363 = vmatprep.subr.mxu0 0.0
        %364 = vmatpush1.msra.mxu0 0.0
        %365 = vmatprep.subr.mxu0 0.0
        %366 = vmatpush1.msra.mxu0 0.0
        %367 = vmatprep.subr.mxu0 0.0
        %368 = vmatpush1.msra.mxu0 0.0
        %369 = vmatprep.subr.mxu0 0.0
        %370 = vmatpush1.msra.mxu0 0.0
        %371 = vmatprep.subr.mxu0 0.0
        %372 = vmatpush1.msra.mxu0 0.0
        %373 = vmatprep.subr.mxu0 0.0
        %374 = vmatpush1.msra.mxu0 0.0
        %375 = vmatprep.subr.mxu0 0.0
        %376 = vmatpush1.msra.mxu0 0.0
        %377 = vmatprep.mubr.f32.mxu0 0.0
        %378 = vmatmul.mubr.f32.gmra.mrb[0].mxu0 %v308
        %v379 = vpop.f32.mrb[0].mxu0
        %v380 = vadd.f32 %v305, %v379
        %v381 = vpop.f32.mrb[0].mxu0
        %382 = vmatprep.mubr.f32.mxu0 0.0
        %383 = vmatmul.mubr.f32.gmra.mrb[0].mxu0 %v311
        %v384 = vpop.f32.mrb[0].mxu0
        %v385 = vadd.f32 %v305, %v384
        %v386 = vpop.f32.mrb[0].mxu0
        %387 = vdwg.mxu0
        %v388 = vtanh.pop %v380
        %v389 = vtanh.pop %v385
        %v390 = vld [vmem:[#allocation5] sm:$0xff]
        %v391 = vld [vmem:[#allocation5 + $0x8] sm:$0xff]
        %v392 = vld [vmem:[#allocation5 + $0x10] sm:$0xff]
        %v393 = vld [vmem:[#allocation5 + $0x18] sm:$0xff]
        %v394 = vld [vmem:[#allocation5 + $0x20] sm:$0xff]
        %v395 = vld [vmem:[#allocation5 + $0x28] sm:$0xff]
        %v396 = vld [vmem:[#allocation5 + $0x30] sm:$0xff]
        %v397 = vld [vmem:[#allocation5 + $0x38] sm:$0xff]
        %v398 = vld [vmem:[#allocation5 + $0x40] sm:$0xff]
        %v399 = vld [vmem:[#allocation5 + $0x48] sm:$0xff]
        %v400 = vld [vmem:[#allocation5 + $0x50] sm:$0xff]
        %v401 = vld [vmem:[#allocation5 + $0x58] sm:$0xff]
        %v402 = vld [vmem:[#allocation5 + $0x60] sm:$0xff]
        %v403 = vld [vmem:[#allocation5 + $0x68] sm:$0xff]
        %v404 = vld [vmem:[#allocation5 + $0x70] sm:$0xff]
        %v405 = vld [vmem:[#allocation5 + $0x78] sm:$0xff]
        %v406 = vld [vmem:[#allocation5 + $0x80] sm:$0xff]
        %v407 = vld [vmem:[#allocation5 + $0x88] sm:$0xff]
        %v408 = vld [vmem:[#allocation5 + $0x90] sm:$0xff]
        %v409 = vld [vmem:[#allocation5 + $0x98] sm:$0xff]
        %v410 = vld [vmem:[#allocation5 + $0xa0] sm:$0xff]
        %v411 = vld [vmem:[#allocation5 + $0xa8] sm:$0xff]
        %v412 = vld [vmem:[#allocation5 + $0xb0] sm:$0xff]
        %v413 = vld [vmem:[#allocation5 + $0xb8] sm:$0xff]
        %v414 = vld [vmem:[#allocation5 + $0xc0] sm:$0xff]
        %v415 = vld [vmem:[#allocation5 + $0xc8] sm:$0xff]
        %v416 = vld [vmem:[#allocation5 + $0xd0] sm:$0xff]
        %v417 = vld [vmem:[#allocation5 + $0xd8] sm:$0xff]
        %v418 = vld [vmem:[#allocation5 + $0xe0] sm:$0xff]
        %v419 = vld [vmem:[#allocation5 + $0xe8] sm:$0xff]
        %v420 = vld [vmem:[#allocation5 + $0xf0] sm:$0xff]
        %v421 = vld [vmem:[#allocation5 + $0xf8] sm:$0xff]
        %s422 = scalar_lea.vmem [#allocation5], 256
        %v423 = vld [vmem:[%s422] ss:$8 sm:$0x3]
        %v425 = vlaneseq
        %v426 = vshrl.u32 %v425, 7
        %v427 = vsub.s32 0, %v426
        %v428 = vrot.slane %v423, %v427
        %v429 = vlaneseq
        %v430 = vshrl.u32 %v429, 7
        %v431 = vsub.s32 1, %v430
        %v432 = vrot.slane %v423, %v431
        %435 = vmatprep.subr.mxu0 %v391
        %436 = vmatpush1.msra.mxu0 %v390
        %437 = vmatprep.subr.mxu0 %v393
        %438 = vmatpush1.msra.mxu0 %v392
        %439 = vmatprep.subr.mxu0 %v395
        %440 = vmatpush1.msra.mxu0 %v394
        %441 = vmatprep.subr.mxu0 %v397
        %442 = vmatpush1.msra.mxu0 %v396
        %443 = vmatprep.subr.mxu0 %v399
        %444 = vmatpush1.msra.mxu0 %v398
        %445 = vmatprep.subr.mxu0 %v401
        %446 = vmatpush1.msra.mxu0 %v400
        %447 = vmatprep.subr.mxu0 %v403
        %448 = vmatpush1.msra.mxu0 %v402
        %449 = vmatprep.subr.mxu0 %v405
        %450 = vmatpush1.msra.mxu0 %v404
        %451 = vmatprep.subr.mxu0 %v407
        %452 = vmatpush1.msra.mxu0 %v406
        %453 = vmatprep.subr.mxu0 %v409
        %454 = vmatpush1.msra.mxu0 %v408
        %455 = vmatprep.subr.mxu0 %v411
        %456 = vmatpush1.msra.mxu0 %v410
        %457 = vmatprep.subr.mxu0 %v413
        %458 = vmatpush1.msra.mxu0 %v412
        %459 = vmatprep.subr.mxu0 %v415
        %460 = vmatpush1.msra.mxu0 %v414
        %461 = vmatprep.subr.mxu0 %v417
        %462 = vmatpush1.msra.mxu0 %v416
        %463 = vmatprep.subr.mxu0 %v419
        %464 = vmatpush1.msra.mxu0 %v418
        %465 = vmatprep.subr.mxu0 %v421
        %466 = vmatpush1.msra.mxu0 %v420
        %467 = vmatprep.subr.mxu0 0.0
        %468 = vmatpush1.msra.mxu0 0.0
        %469 = vmatprep.subr.mxu0 0.0
        %470 = vmatpush1.msra.mxu0 0.0
        %471 = vmatprep.subr.mxu0 0.0
        %472 = vmatpush1.msra.mxu0 0.0
        %473 = vmatprep.subr.mxu0 0.0
        %474 = vmatpush1.msra.mxu0 0.0
        %475 = vmatprep.subr.mxu0 0.0
        %476 = vmatpush1.msra.mxu0 0.0
        %477 = vmatprep.subr.mxu0 0.0
        %478 = vmatpush1.msra.mxu0 0.0
        %479 = vmatprep.subr.mxu0 0.0
        %480 = vmatpush1.msra.mxu0 0.0
        %481 = vmatprep.subr.mxu0 0.0
        %482 = vmatpush1.msra.mxu0 0.0
        %483 = vmatprep.subr.mxu0 0.0
        %484 = vmatpush1.msra.mxu0 0.0
        %485 = vmatprep.subr.mxu0 0.0
        %486 = vmatpush1.msra.mxu0 0.0
        %487 = vmatprep.subr.mxu0 0.0
        %488 = vmatpush1.msra.mxu0 0.0
        %489 = vmatprep.subr.mxu0 0.0
        %490 = vmatpush1.msra.mxu0 0.0
        %491 = vmatprep.subr.mxu0 0.0
        %492 = vmatpush1.msra.mxu0 0.0
        %493 = vmatprep.subr.mxu0 0.0
        %494 = vmatpush1.msra.mxu0 0.0
        %495 = vmatprep.subr.mxu0 0.0
        %496 = vmatpush1.msra.mxu0 0.0
        %497 = vmatprep.subr.mxu0 0.0
        %498 = vmatpush1.msra.mxu0 0.0
        %499 = vmatprep.mubr.f32.mxu0 0.0
        %500 = vmatmul.mubr.f32.gmra.mrb[0].mxu0 %v388
        %v501 = vpop.f32.mrb[0].mxu0
        %v502 = vadd.f32 %v428, %v501
        %v503 = vpop.f32.mrb[0].mxu0
        %v504 = vadd.f32 %v432, %v503
        %505 = vmatprep.mubr.f32.mxu0 0.0
        %506 = vmatmul.mubr.f32.gmra.mrb[0].mxu0 %v389
        %v507 = vpop.f32.mrb[0].mxu0
        %v508 = vadd.f32 %v428, %v507
        %v509 = vpop.f32.mrb[0].mxu0
        %v510 = vadd.f32 %v432, %v509
        %511 = vdwg.mxu0
        %512 = vst [vmem:[%s275] sm:$0xff] %v502
        %513 = vst [vmem:[%s275 + $0x8] sm:$0xff] %v504
        %514 = vst [vmem:[%s275 + $0x10] sm:$0xff] %v508
        %515 = vst [vmem:[%s275 + $0x18] sm:$0xff] %v510
        %v516 = vld [vmem:[%s242] sm:$0xff]
        %v517 = vld [vmem:[%s242 + $0x8] sm:$0xff]
        %v518 = vld [vmem:[%s242 + $0x10] sm:$0xff]
        %v519 = vld [vmem:[%s242 + $0x18] sm:$0xff]
        %v520 = vsub.f32 %v516, %v502
        %v521 = vsub.f32 %v517, %v504
        %v522 = vsub.f32 %v518, %v508
        %v523 = vsub.f32 %v519, %v510
        %v524 = vmul.f32 %v520, %v520
        %v525 = vmul.f32 %v521, %v521
        %v526 = vmul.f32 %v522, %v522
        %v527 = vmul.f32 %v523, %v523
        %v528 = vadd.f32 %v524, %v525
        %529 = vadd.xlane.f32.xlu0 %v528
        %v530 = vpop.xlane.xlu0 %529
        %v531 = vadd.f32 %v526, %v527
        %532 = vadd.xlane.f32.xlu0 %v531
        %v533 = vpop.xlane.xlu0 %532
        %v534 = vmul.f32 %v530, -50.0
        %v535 = vmul.f32 %v533, -50.0
        %v536 = vsub.f32 %v534, -354.21353
        %v537 = vsub.f32 %v535, -354.21353
        %vm538 = vcmask 7168
        %539 = vst.msk [vmem:[%s295] sm:$0xff] %vm538, %v536
        %540 = vst.msk [vmem:[%s295 + $0x8] sm:$0xff] %vm538, %v537
        %s541 = sand.u32 %s126, 1
        %s542 = scalar_lea.sflag [#allocation4], %s541
        %s543 = sand.u32 %s126, 1
        %s544 = smul.addr %s543, 32
        %s545 = scalar_lea.vmem [#allocation7], %s544
        %s546 = smul.u32 2, %s24
        %p547 = scmp.lt.s32.totalorder %s546, 3
        %s548 = scalar_select %p547, %s546, 3
        %s549 = smul.addr %s548, 8
        %s550 = scalar_lea.vmem %s5, %s549
        // Predicated region
        $region45: #{tpu_custom_call.1} parent=35 // pred_check
          %p551 = pneg %p136
        $region46: #{tpu_custom_call.1} parent=35 // pred_check_branch
          %553 = sbr.rel (%p551) target = $region48
        $region47: #{tpu_custom_call.1} parent=35 // pred_region
          %s554 = smul.u32 2, %s24
          %s556 = ssub.s32 512, 512
          %557 = vsyncadd %s542, %s556
          %s558 = smul.addr %s554, 2
          %s559 = smul.addr %s558, 128
          %s560 = scalar_lea.hbm %s4, %s559
          %s561 = sshll.u32 %s545, 4
          %s562 = int_to_ptr.vmem [resolvable:$true] %s561
          %567 = dma.vmem_to_hbm [thread:$0]  %s562, 512, %s560, %s542, 256, 256, 16
        $region48: #{tpu_custom_call.1} parent=35 // pred_fallthru
          _
        // Predicated region
        $region49: #{tpu_custom_call.1} parent=35 // pred_check
          %p568 = pneg %p162
        $region50: #{tpu_custom_call.1} parent=35 // pred_check_branch
          %570 = sbr.rel (%p568) target = $region52
        $region51: #{tpu_custom_call.1} parent=35 // pred_region
          %s571 = smul.u32 2, %s24
        $region52: #{tpu_custom_call.1} parent=35 // pred_fallthru
          _
      $region36: #{tpu_custom_call.1} parent=5 // pred_fallthru
        _
      %p572 = scmp.le.s32.totalorder 2, %s19
      // Predicated region
      $region53: #{tpu_custom_call.1} parent=5 // pred_check
        %p573 = pneg %p572
      $region54: #{tpu_custom_call.1} parent=5 // pred_check_branch
        %575 = sbr.rel (%p573) target = $region56
      $region55: #{tpu_custom_call.1} parent=5 // pred_region
        %s576 = ssub.s32 %s19, 2
        // Predicated region
        $region57: #{tpu_custom_call.1} parent=55 // pred_check
          %p577 = pneg %p142
        $region58: #{tpu_custom_call.1} parent=55 // pred_check_branch
          %579 = sbr.rel (%p577) target = $region60
        $region59: #{tpu_custom_call.1} parent=55 // pred_region
          %s580 = sand.u32 %s127, 1
          %s581 = scalar_lea.sflag [#allocation4], %s580
          %s582 = sand.u32 %s127, 1
          %s583 = smul.addr %s582, 32
          %s584 = scalar_lea.vmem [#allocation7], %s583
          %585 = dma.done %s581, 512
        $region60: #{tpu_custom_call.1} parent=55 // pred_fallthru
          _
        // Predicated region
        $region61: #{tpu_custom_call.1} parent=55 // pred_check
          %p586 = pneg %p168
        $region62: #{tpu_custom_call.1} parent=55 // pred_check_branch
          %588 = sbr.rel (%p586) target = $region64
        $region63: #{tpu_custom_call.1} parent=55 // pred_region
          %s589 = smul.u32 2, %s25
          %p590 = scmp.lt.s32.totalorder %s589, 3
          %s591 = scalar_select %p590, %s589, 3
          %s592 = smul.addr %s591, 8
          %s593 = scalar_lea.vmem %s5, %s592
        $region64: #{tpu_custom_call.1} parent=55 // pred_fallthru
          _
      $region56: #{tpu_custom_call.1} parent=5 // pred_fallthru
        _
    $region6: #{tpu_custom_call.1} parent=1 // loop_footer
      %s23 = sadd.s32 1, %s19
    $region7: #{tpu_custom_call.1} parent=1 // loop_footer_branch
      %18 = sbr.rel target = $region3
    $region8: #{tpu_custom_call.1} parent=1 // loop_exit
      _
    %594 = vsyncpa [#allocation3], 1
    %s595 = scalar_lea.sflag [#allocation3], 1
    %596 = vsyncpa %s595, 1
    %597 = vsyncpa [#allocation6], 1
    %598 = vsyncpa [#allocation4], 1
    %s599 = scalar_lea.sflag [#allocation4], 1
    %600 = vsyncpa %s599, 1

</llo_original>
